<compile_context>
chip_gen: v6e
topology: v6e:2x2x1
jax: 0.10.0
libtpu: 0.0.40
codegen_flags: <defaults>
</compile_context>

<pallas_src>
import jax
import jax.numpy as jnp
from jax.experimental import pallas as pl
from jax.experimental.pallas import tpu as pltpu


# ----------------------------------------------------------------------------
# Block-size helpers (respect the TPU (8, 128) blocking rule: a blocked dim that
# appears as one of the last two dims must be a multiple of 8 or the full dim).
# ----------------------------------------------------------------------------
def _pick_batch_block(B, per_batch_bytes, budget):
    if B * per_batch_bytes <= budget:
        return B
    for c in range(8 * (B // 8), 0, -8):
        if B % c == 0 and c * per_batch_bytes <= budget:
            return c
    return B


def _pick_seq_chunk(T, per_row_bytes, budget):
    if T * per_row_bytes <= budget:
        return T
    for c in range(8 * (T // 8), 0, -8):
        if T % c == 0 and c * per_row_bytes <= budget:
            return c
    return T


# ----------------------------------------------------------------------------
# Kernel A: fused  diff-sum  ->  U_* conditioning  ->  rsample  ->  d-projection
# ----------------------------------------------------------------------------
def _latent_kernel(x_ref, y_ref, cond_ref,
                   uwh_ref, uwc_ref, ub_ref,
                   wm_ref, bm_ref, wv_ref, bv_ref, eps_ref,
                   wdz_ref, wdc_ref, wdb_ref,
                   dproj_ref, kl_ref,
                   acc_ref):
    k = pl.program_id(1)

    @pl.when(k == 0)
    def _():
        acc_ref[...] = jnp.zeros_like(acc_ref)

    # Streaming T-chunk reduction (f32 accumulate, inputs may be bf16).
    acc_ref[...] += (jnp.sum(y_ref[...].astype(jnp.float32), axis=1)
                     - jnp.sum(x_ref[...].astype(jnp.float32), axis=1))

    @pl.when(k == pl.num_programs(1) - 1)
    def _():
        diff = acc_ref[...]                                   # [Bblk, H]
        cond = cond_ref[...].astype(jnp.float32)              # [Bblk, C]

        # U_* : relu([diff, cond] @ W + b), concat folded into a split matmul.
        u = jnp.dot(diff, uwh_ref[...], preferred_element_type=jnp.float32)
        u += jnp.dot(cond, uwc_ref[...], preferred_element_type=jnp.float32)
        u += ub_ref[...]
        u = jnp.maximum(u, 0.0)

        # rsample
        z_mean = jnp.dot(u, wm_ref[...], preferred_element_type=jnp.float32) + bm_ref[...]
        z_log_var = -jnp.abs(
            jnp.dot(u, wv_ref[...], preferred_element_type=jnp.float32) + bv_ref[...])
        std = jnp.exp(0.5 * z_log_var)                        # single EUP exp
        var = std * std                                       # == exp(z_log_var)
        kl_ref[...] = -0.5 * jnp.sum(1.0 + z_log_var - z_mean * z_mean - var,
                                     axis=-1, keepdims=True)  # [Bblk, 1]
        z = z_mean + std * eps_ref[...]                       # [Bblk, L]

        # W_* bias path: [z, cond] @ Wd + b  (hoisted out of the per-token fuse kernel).
        d = jnp.dot(z, wdz_ref[...], preferred_element_type=jnp.float32)
        d += jnp.dot(cond, wdc_ref[...], preferred_element_type=jnp.float32)
        d += wdb_ref[...]
        dproj_ref[...] = d


def latent_path(x_seq, y_seq, cond, eps,
                u_wh, u_wc, u_b,
                w_mean, b_mean, w_var, b_var,
                wd_z, wd_c, wd_b,
                *, vmem_budget=12 << 20):
    B, T, H = x_seq.shape
    C = cond.shape[-1]
    L = w_mean.shape[-1]
    Hout = wd_z.shape[-1]
    item = x_seq.dtype.itemsize

    # x & y chunks are double-buffered -> 4 live sequence copies per grid step.
    bblk = _pick_batch_block(B, 4 * T * H * item, vmem_budget)
    tc = _pick_seq_chunk(T, 4 * bblk * H * item, vmem_budget)
    grid = (B // bblk, T // tc)

    def full(shape):
        return pl.BlockSpec(shape, lambda i, k, _s=len(shape): (0,) * _s)

    d_proj, kl_rows = pl.pallas_call(
        _latent_kernel,
        out_shape=(jax.ShapeDtypeStruct((B, Hout), jnp.float32),
                   jax.ShapeDtypeStruct((B, 1), jnp.float32)),
        grid=grid,
        in_specs=[
            pl.BlockSpec((bblk, tc, H), lambda i, k: (i, k, 0)),      # x_seq
            pl.BlockSpec((bblk, tc, H), lambda i, k: (i, k, 0)),      # y_seq
            pl.BlockSpec((bblk, C), lambda i, k: (i, 0)),             # cond
            full((H, H)), full((C, H)), full((1, H)),                 # U_* split weights + b
            full((H, L)), full((1, L)), full((H, L)), full((1, L)),   # mean / var linears
            pl.BlockSpec((bblk, L), lambda i, k: (i, 0)),             # eps
            full((L, Hout)), full((C, Hout)), full((1, Hout)),        # W_* latent/cond split + b
        ],
        out_specs=(pl.BlockSpec((bblk, Hout), lambda i, k: (i, 0)),
                   pl.BlockSpec((bblk, 1), lambda i, k: (i, 0))),
        scratch_shapes=[pltpu.VMEM((bblk, H), jnp.float32)],
        compiler_params=pltpu.CompilerParams(
            dimension_semantics=("parallel", "arbitrary"),
            vmem_limit_bytes=32 * 1024 * 1024),
    )(x_seq, y_seq, cond, u_wh, u_wc, u_b,
      w_mean, b_mean, w_var, b_var, eps,
      wd_z, wd_c, wd_b)
    return d_proj, kl_rows


# ----------------------------------------------------------------------------
# Kernel B: sequence fuse  —  relu( x @ Wx + d_proj[batch] )  with (Bblk*T) MXU rows
# ----------------------------------------------------------------------------
def _seq_fuse_kernel(x_ref, d_ref, wx_ref, o_ref):
    bblk, t, hout = o_ref.shape
    # Batch + sequence rows packed into one matmul: M = bblk * t.
    acc = jnp.dot(x_ref[...], wx_ref[...], preferred_element_type=jnp.float32)
    acc = acc.reshape(bblk, t, hout) + d_ref[...][:, None, :]   # per-batch bias (VPU broadcast)
    o_ref[...] = jnp.maximum(acc, 0.0).astype(o_ref.dtype)


def seq_fuse(x_seq, d_proj, wx, *, out_dtype=jnp.float32, vmem_budget=12 << 20):
    # TODO(synk): with Hout < 128 the output store is lane-masked; a [B, T*Hout] lane-dense slab
    #             would help but needs an in-kernel relayout — skipped for robustness.
    B, T, H = x_seq.shape
    Hout = wx.shape[-1]
    in_item = x_seq.dtype.itemsize
    out_item = jnp.dtype(out_dtype).itemsize

    per_batch = 2 * T * (H * in_item + Hout * out_item)   # double-buffered input + output
    bblk = _pick_batch_block(B, per_batch, vmem_budget)
    if (bblk * T) % 8 != 0 and bblk != B:                 # keep the (8,128) rule on the 2-D view
        bblk = B

    x2d = x_seq.reshape(B * T, H)                         # free row-major reshape
    return pl.pallas_call(
        _seq_fuse_kernel,
        out_shape=jax.ShapeDtypeStruct((B, T, Hout), out_dtype),
        grid=(B // bblk,),
        in_specs=[
            pl.BlockSpec((bblk * T, H), lambda i: (i, 0)),
            pl.BlockSpec((bblk, Hout), lambda i: (i, 0)),
            pl.BlockSpec((H, Hout), lambda i: (0, 0)),
        ],
        out_specs=pl.BlockSpec((bblk, T, Hout), lambda i: (i, 0, 0)),
        compiler_params=pltpu.CompilerParams(
            dimension_semantics=("parallel",),
            vmem_limit_bytes=32 * 1024 * 1024),
    )(x2d, d_proj, wx)


# ----------------------------------------------------------------------------
# Parameter construction (deterministic) and full forward glue
# ----------------------------------------------------------------------------
def init_params(key, hidden_size, latent_size, cond_size):
    H, L, C = hidden_size, latent_size, cond_size
    ks = jax.random.split(key, 22)
    g = lambda k, shp: jax.random.normal(k, shp, jnp.float32) * 0.05
    return {
        # U_tree / U_graph : Linear(H + C -> H), concat folded into split matmul
        "U_tree_Wh": g(ks[0], (H, H)), "U_tree_Wc": g(ks[1], (C, H)), "U_tree_b": g(ks[2], (1, H)),
        "U_graph_Wh": g(ks[3], (H, H)), "U_graph_Wc": g(ks[4], (C, H)), "U_graph_b": g(ks[5], (1, H)),
        # T/G mean / var : Linear(H -> L)
        "T_mean_W": g(ks[6], (H, L)), "T_mean_b": g(ks[7], (1, L)),
        "T_var_W": g(ks[8], (H, L)), "T_var_b": g(ks[9], (1, L)),
        "G_mean_W": g(ks[10], (H, L)), "G_mean_b": g(ks[11], (1, L)),
        "G_var_W": g(ks[12], (H, L)), "G_var_b": g(ks[13], (1, L)),
        # W_tree / W_graph : Linear(H + L + C -> H) split into x / latent / cond parts
        "W_tree_Wx": g(ks[14], (H, H)), "W_tree_Wz": g(ks[15], (L, H)),
        "W_tree_Wc": g(ks[16], (C, H)), "W_tree_b": g(ks[17], (1, H)),
        "W_graph_Wx": g(ks[18], (H, H)), "W_graph_Wz": g(ks[19], (L, H)),
        "W_graph_Wc": g(ks[20], (C, H)), "W_graph_b": g(ks[21], (1, H)),
    }


def hier_cond_vgnn_forward(params, x_tree, x_graph, y_tree, y_graph, cond,
                           eps_tree, eps_graph, beta, *, compute_dtype=jnp.bfloat16):
    B = x_tree.shape[0]

    # bf16 for the big sequence reads and the H x H fuse matmuls; all accumulation stays f32.
    xt = x_tree.astype(compute_dtype)
    xg = x_graph.astype(compute_dtype)
    yt = y_tree.astype(compute_dtype)
    yg = y_graph.astype(compute_dtype)

    # --- fused diff-sum -> U_* -> rsample -> d-projection (Pallas kernel A, per modality) ---
    d_tree, kl_tree = latent_path(
        xt, yt, cond, eps_tree,
        params["U_tree_Wh"], params["U_tree_Wc"], params["U_tree_b"],
        params["T_mean_W"], params["T_mean_b"], params["T_var_W"], params["T_var_b"],
        params["W_tree_Wz"], params["W_tree_Wc"], params["W_tree_b"])
    d_graph, kl_graph = latent_path(
        xg, yg, cond, eps_graph,
        params["U_graph_Wh"], params["U_graph_Wc"], params["U_graph_b"],
        params["G_mean_W"], params["G_mean_b"], params["G_var_W"], params["G_var_b"],
        params["W_graph_Wz"], params["W_graph_Wc"], params["W_graph_b"])

    # torch: tree_kl = sum(...)/B ; graph_kl = sum(...)/B ; kl_div = tree_kl + graph_kl
    kl_div = (jnp.sum(kl_tree) + jnp.sum(kl_graph)) / B

    # --- sequence fuse (Pallas kernel B, per modality) ---
    x_tree_out = seq_fuse(xt, d_tree, params["W_tree_Wx"].astype(compute_dtype))
    x_graph_out = seq_fuse(xg, d_graph, params["W_graph_Wx"].astype(compute_dtype))

    # TODO(synk): HierMPNDecoder loss/accuracy terms not implemented; return fused vecs + weighted KL.
    weighted_kl = beta * kl_div
    return x_tree_out, x_graph_out, kl_div, weighted_kl


if __name__ == "__main__":
    # Small, forward-consistent shapes
    B, Tt, Tg = 2, 8, 8          # batch, tree seq len, graph seq len
    H, L, C = 32, 16, 4          # hidden_size, latent_size, cond_size
    beta = 0.3

    key = jax.random.PRNGKey(0)
    k_par, k_xt, k_xg, k_yt, k_yg, k_c, k_et, k_eg = jax.random.split(key, 8)

    params = init_params(k_par, H, L, C)

    x_tree = jax.random.normal(k_xt, (B, Tt, H), jnp.float32)
    x_graph = jax.random.normal(k_xg, (B, Tg, H), jnp.float32)
    y_tree = jax.random.normal(k_yt, (B, Tt, H), jnp.float32)
    y_graph = jax.random.normal(k_yg, (B, Tg, H), jnp.float32)
    cond = jax.random.normal(k_c, (B, C), jnp.float32)
    eps_tree = jax.random.normal(k_et, (B, L), jnp.float32)
    eps_graph = jax.random.normal(k_eg, (B, L), jnp.float32)

    out = hier_cond_vgnn_forward(params, x_tree, x_graph, y_tree, y_graph, cond,
                                 eps_tree, eps_graph, beta)
    out = jax.block_until_ready(out)

    x_tree_out, x_graph_out, kl_div, weighted_kl = out
    assert x_tree_out.shape == (B, Tt, H)
    assert x_graph_out.shape == (B, Tg, H)
    assert kl_div.shape == ()
    print("KERNEL_OK")
</pallas_src>

<mosaic_0001>
module attributes {stable_mosaic.version = 11 : i64} {
  func.func @_latent_kernel(%arg0: i32, %arg1: i32, %arg2: memref<2x8x32xbf16, #tpu.memory_space<vmem>>, %arg3: memref<2x8x32xbf16, #tpu.memory_space<vmem>>, %arg4: memref<2x4xf32, #tpu.memory_space<vmem>>, %arg5: memref<32x32xf32, #tpu.memory_space<vmem>>, %arg6: memref<4x32xf32, #tpu.memory_space<vmem>>, %arg7: memref<1x32xf32, #tpu.memory_space<vmem>>, %arg8: memref<32x16xf32, #tpu.memory_space<vmem>>, %arg9: memref<1x16xf32, #tpu.memory_space<vmem>>, %arg10: memref<32x16xf32, #tpu.memory_space<vmem>>, %arg11: memref<1x16xf32, #tpu.memory_space<vmem>>, %arg12: memref<2x16xf32, #tpu.memory_space<vmem>>, %arg13: memref<16x32xf32, #tpu.memory_space<vmem>>, %arg14: memref<4x32xf32, #tpu.memory_space<vmem>>, %arg15: memref<1x32xf32, #tpu.memory_space<vmem>>, %arg16: memref<2x32xf32, #tpu.memory_space<vmem>>, %arg17: memref<2x1xf32, #tpu.memory_space<vmem>>, %arg18: memref<2x32xf32, #tpu.memory_space<vmem>>) attributes {dimension_semantics = [#tpu.dimension_semantics<parallel>, #tpu.dimension_semantics<arbitrary>], iteration_bounds = array<i64: 1, 1>, scalar_prefetch = 0 : i64, scratch_operands = 1 : i64, tpu.core_type = #tpu.core_type<tc>, window_params = [{transform_indices = @transform_0, window_bounds = array<i64: 2, 8, 32>}, {transform_indices = @transform_1, window_bounds = array<i64: 2, 8, 32>}, {transform_indices = @transform_2, window_bounds = array<i64: 2, 4>}, {pipeline_mode = #tpu.pipeline_mode<synchronous>, transform_indices = @transform_3, window_bounds = array<i64: 32, 32>}, {pipeline_mode = #tpu.pipeline_mode<synchronous>, transform_indices = @transform_4, window_bounds = array<i64: 4, 32>}, {pipeline_mode = #tpu.pipeline_mode<synchronous>, transform_indices = @transform_5, window_bounds = array<i64: 1, 32>}, {pipeline_mode = #tpu.pipeline_mode<synchronous>, transform_indices = @transform_6, window_bounds = array<i64: 32, 16>}, {pipeline_mode = #tpu.pipeline_mode<synchronous>, transform_indices = @transform_7, window_bounds = array<i64: 1, 16>}, {pipeline_mode = #tpu.pipeline_mode<synchronous>, transform_indices = @transform_8, window_bounds = array<i64: 32, 16>}, {pipeline_mode = #tpu.pipeline_mode<synchronous>, transform_indices = @transform_9, window_bounds = array<i64: 1, 16>}, {transform_indices = @transform_10, window_bounds = array<i64: 2, 16>}, {pipeline_mode = #tpu.pipeline_mode<synchronous>, transform_indices = @transform_11, window_bounds = array<i64: 16, 32>}, {pipeline_mode = #tpu.pipeline_mode<synchronous>, transform_indices = @transform_12, window_bounds = array<i64: 4, 32>}, {pipeline_mode = #tpu.pipeline_mode<synchronous>, transform_indices = @transform_13, window_bounds = array<i64: 1, 32>}, {transform_indices = @transform_14, window_bounds = array<i64: 2, 32>}, {transform_indices = @transform_15, window_bounds = array<i64: 2, 1>}]} {
    %c0_i32 = arith.constant 0 : i32
    %0 = arith.cmpi eq, %arg1, %c0_i32 : i32
    %1 = arith.extui %0 : i1 to i32
    %c0_i32_0 = arith.constant 0 : i32
    %2 = arith.cmpi ne, %1, %c0_i32_0 : i32
    scf.if %2 {
      %cst_13 = arith.constant 0.000000e+00 : f32
      %16 = vector.broadcast %cst_13 : f32 to vector<2x32xf32>
      %c0_14 = arith.constant 0 : index
      %c0_15 = arith.constant 0 : index
      %17 = vector.load %arg18[%c0_14, %c0_15] : memref<2x32xf32, #tpu.memory_space<vmem>>, vector<2x32xf32>
      tpu.vector_store %arg18[%c0_14, %c0_15], %16 {strides = array<i32>} : memref<2x32xf32, #tpu.memory_space<vmem>>, vector<2x32xf32>,
    } else {
    }
    %c0 = arith.constant 0 : index
    %c0_1 = arith.constant 0 : index
    %3 = vector.load %arg18[%c0, %c0_1] : memref<2x32xf32, #tpu.memory_space<vmem>>, vector<2x32xf32>
    %c0_2 = arith.constant 0 : index
    %c0_3 = arith.constant 0 : index
    %c0_4 = arith.constant 0 : index
    %4 = vector.load %arg3[%c0_2, %c0_3, %c0_4] : memref<2x8x32xbf16, #tpu.memory_space<vmem>>, vector<2x8x32xbf16>
    %5 = arith.extf %4 : vector<2x8x32xbf16> to vector<2x8x32xf32>
    %cst = arith.constant dense<0.000000e+00> : vector<2x32xf32>
    %6 = vector.multi_reduction <add>, %5, %cst [1] : vector<2x8x32xf32> to vector<2x32xf32>
    %c0_5 = arith.constant 0 : index
    %c0_6 = arith.constant 0 : index
    %c0_7 = arith.constant 0 : index
    %7 = vector.load %arg2[%c0_5, %c0_6, %c0_7] : memref<2x8x32xbf16, #tpu.memory_space<vmem>>, vector<2x8x32xbf16>
    %8 = arith.extf %7 : vector<2x8x32xbf16> to vector<2x8x32xf32>
    %cst_8 = arith.constant dense<0.000000e+00> : vector<2x32xf32>
    %9 = vector.multi_reduction <add>, %8, %cst_8 [1] : vector<2x8x32xf32> to vector<2x32xf32>
    %10 = arith.subf %6, %9 : vector<2x32xf32>
    %11 = arith.addf %3, %10 : vector<2x32xf32>
    %c0_9 = arith.constant 0 : index
    %c0_10 = arith.constant 0 : index
    %12 = vector.load %arg18[%c0_9, %c0_10] : memref<2x32xf32, #tpu.memory_space<vmem>>, vector<2x32xf32>
    tpu.vector_store %arg18[%c0_9, %c0_10], %11 {strides = array<i32>} : memref<2x32xf32, #tpu.memory_space<vmem>>, vector<2x32xf32>,
    %c0_i32_11 = arith.constant 0 : i32
    %13 = arith.cmpi eq, %arg1, %c0_i32_11 : i32
    %14 = arith.extui %13 : i1 to i32
    %c0_i32_12 = arith.constant 0 : i32
    %15 = arith.cmpi ne, %14, %c0_i32_12 : i32
    scf.if %15 {
      %c0_13 = arith.constant 0 : index
      %c0_14 = arith.constant 0 : index
      %16 = vector.load %arg18[%c0_13, %c0_14] : memref<2x32xf32, #tpu.memory_space<vmem>>, vector<2x32xf32>
      %c0_15 = arith.constant 0 : index
      %c0_16 = arith.constant 0 : index
      %17 = vector.load %arg4[%c0_15, %c0_16] : memref<2x4xf32, #tpu.memory_space<vmem>>, vector<2x4xf32>
      %c0_17 = arith.constant 0 : index
      %c0_18 = arith.constant 0 : index
      %18 = vector.load %arg5[%c0_17, %c0_18] : memref<32x32xf32, #tpu.memory_space<vmem>>, vector<32x32xf32>
      %cst_19 = arith.constant dense<0.000000e+00> : vector<2x32xf32>
      %19 = tpu.matmul %16, %18, %cst_19 {dimension_numbers = #tpu.dot_dimension_numbers<[1], [0], [0], [1], [0, 0, 1, 1], [], []>} : vector<2x32xf32>, vector<32x32xf32>, vector<2x32xf32> -> vector<2x32xf32>
      %c0_20 = arith.constant 0 : index
      %c0_21 = arith.constant 0 : index
      %20 = vector.load %arg6[%c0_20, %c0_21] : memref<4x32xf32, #tpu.memory_space<vmem>>, vector<4x32xf32>
      %cst_22 = arith.constant dense<0.000000e+00> : vector<2x32xf32>
      %21 = tpu.matmul %17, %20, %cst_22 {dimension_numbers = #tpu.dot_dimension_numbers<[1], [0], [0], [1], [0, 0, 1, 1], [], []>} : vector<2x4xf32>, vector<4x32xf32>, vector<2x32xf32> -> vector<2x32xf32>
      %22 = arith.addf %19, %21 : vector<2x32xf32>
      %c0_23 = arith.constant 0 : index
      %c0_24 = arith.constant 0 : index
      %23 = vector.load %arg7[%c0_23, %c0_24] : memref<1x32xf32, #tpu.memory_space<vmem>>, vector<1x32xf32>
      %24 = vector.broadcast %23 : vector<1x32xf32> to vector<2x32xf32>
      %25 = arith.addf %22, %24 : vector<2x32xf32>
      %cst_25 = arith.constant 0.000000e+00 : f32
      %26 = vector.broadcast %cst_25 : f32 to vector<2x32xf32>
      %27 = arith.maximumf %25, %26 : vector<2x32xf32>
      %c0_26 = arith.constant 0 : index
      %c0_27 = arith.constant 0 : index
      %28 = vector.load %arg8[%c0_26, %c0_27] : memref<32x16xf32, #tpu.memory_space<vmem>>, vector<32x16xf32>
      %cst_28 = arith.constant dense<0.000000e+00> : vector<2x16xf32>
      %29 = tpu.matmul %27, %28, %cst_28 {dimension_numbers = #tpu.dot_dimension_numbers<[1], [0], [0], [1], [0, 0, 1, 1], [], []>} : vector<2x32xf32>, vector<32x16xf32>, vector<2x16xf32> -> vector<2x16xf32>
      %c0_29 = arith.constant 0 : index
      %c0_30 = arith.constant 0 : index
      %30 = vector.load %arg9[%c0_29, %c0_30] : memref<1x16xf32, #tpu.memory_space<vmem>>, vector<1x16xf32>
      %31 = vector.broadcast %30 : vector<1x16xf32> to vector<2x16xf32>
      %32 = arith.addf %29, %31 : vector<2x16xf32>
      %c0_31 = arith.constant 0 : index
      %c0_32 = arith.constant 0 : index
      %33 = vector.load %arg10[%c0_31, %c0_32] : memref<32x16xf32, #tpu.memory_space<vmem>>, vector<32x16xf32>
      %cst_33 = arith.constant dense<0.000000e+00> : vector<2x16xf32>
      %34 = tpu.matmul %27, %33, %cst_33 {dimension_numbers = #tpu.dot_dimension_numbers<[1], [0], [0], [1], [0, 0, 1, 1], [], []>} : vector<2x32xf32>, vector<32x16xf32>, vector<2x16xf32> -> vector<2x16xf32>
      %c0_34 = arith.constant 0 : index
      %c0_35 = arith.constant 0 : index
      %35 = vector.load %arg11[%c0_34, %c0_35] : memref<1x16xf32, #tpu.memory_space<vmem>>, vector<1x16xf32>
      %36 = vector.broadcast %35 : vector<1x16xf32> to vector<2x16xf32>
      %37 = arith.addf %34, %36 : vector<2x16xf32>
      %38 = math.absf %37 : vector<2x16xf32>
      %cst_36 = arith.constant 0.000000e+00 : f32
      %39 = vector.broadcast %cst_36 : f32 to vector<2x16xf32>
      %40 = arith.subf %39, %38 : vector<2x16xf32>
      %cst_37 = arith.constant 5.000000e-01 : f32
      %41 = vector.broadcast %cst_37 : f32 to vector<2x16xf32>
      %42 = arith.mulf %41, %40 : vector<2x16xf32>
      %43 = math.exp %42 : vector<2x16xf32>
      %44 = arith.mulf %43, %43 : vector<2x16xf32>
      %cst_38 = arith.constant 1.000000e+00 : f32
      %45 = vector.broadcast %cst_38 : f32 to vector<2x16xf32>
      %46 = arith.addf %45, %40 : vector<2x16xf32>
      %47 = arith.mulf %32, %32 : vector<2x16xf32>
      %48 = arith.subf %46, %47 : vector<2x16xf32>
      %49 = arith.subf %48, %44 : vector<2x16xf32>
      %cst_39 = arith.constant dense<0.000000e+00> : vector<2xf32>
      %50 = vector.multi_reduction <add>, %49, %cst_39 [1] : vector<2x16xf32> to vector<2xf32>
      %51 = vector.shape_cast %50 : vector<2xf32> to vector<2x1xf32>
      %cst_40 = arith.constant -5.000000e-01 : f32
      %52 = vector.broadcast %cst_40 : f32 to vector<2x1xf32>
      %53 = arith.mulf %52, %51 : vector<2x1xf32>
      %c0_41 = arith.constant 0 : index
      %c0_42 = arith.constant 0 : index
      %54 = vector.load %arg17[%c0_41, %c0_42] : memref<2x1xf32, #tpu.memory_space<vmem>>, vector<2x1xf32>
      tpu.vector_store %arg17[%c0_41, %c0_42], %53 {strides = array<i32>} : memref<2x1xf32, #tpu.memory_space<vmem>>, vector<2x1xf32>,
      %c0_43 = arith.constant 0 : index
      %c0_44 = arith.constant 0 : index
      %55 = vector.load %arg12[%c0_43, %c0_44] : memref<2x16xf32, #tpu.memory_space<vmem>>, vector<2x16xf32>
      %56 = arith.mulf %43, %55 : vector<2x16xf32>
      %57 = arith.addf %32, %56 : vector<2x16xf32>
      %c0_45 = arith.constant 0 : index
      %c0_46 = arith.constant 0 : index
      %58 = vector.load %arg13[%c0_45, %c0_46] : memref<16x32xf32, #tpu.memory_space<vmem>>, vector<16x32xf32>
      %cst_47 = arith.constant dense<0.000000e+00> : vector<2x32xf32>
      %59 = tpu.matmul %57, %58, %cst_47 {dimension_numbers = #tpu.dot_dimension_numbers<[1], [0], [0], [1], [0, 0, 1, 1], [], []>} : vector<2x16xf32>, vector<16x32xf32>, vector<2x32xf32> -> vector<2x32xf32>
      %c0_48 = arith.constant 0 : index
      %c0_49 = arith.constant 0 : index
      %60 = vector.load %arg14[%c0_48, %c0_49] : memref<4x32xf32, #tpu.memory_space<vmem>>, vector<4x32xf32>
      %cst_50 = arith.constant dense<0.000000e+00> : vector<2x32xf32>
      %61 = tpu.matmul %17, %60, %cst_50 {dimension_numbers = #tpu.dot_dimension_numbers<[1], [0], [0], [1], [0, 0, 1, 1], [], []>} : vector<2x4xf32>, vector<4x32xf32>, vector<2x32xf32> -> vector<2x32xf32>
      %62 = arith.addf %59, %61 : vector<2x32xf32>
      %c0_51 = arith.constant 0 : index
      %c0_52 = arith.constant 0 : index
      %63 = vector.load %arg15[%c0_51, %c0_52] : memref<1x32xf32, #tpu.memory_space<vmem>>, vector<1x32xf32>
      %64 = vector.broadcast %63 : vector<1x32xf32> to vector<2x32xf32>
      %65 = arith.addf %62, %64 : vector<2x32xf32>
      %c0_53 = arith.constant 0 : index
      %c0_54 = arith.constant 0 : index
      %66 = vector.load %arg16[%c0_53, %c0_54] : memref<2x32xf32, #tpu.memory_space<vmem>>, vector<2x32xf32>
      tpu.vector_store %arg16[%c0_53, %c0_54], %65 {strides = array<i32>} : memref<2x32xf32, #tpu.memory_space<vmem>>, vector<2x32xf32>,
    } else {
    }
    return
  }
  func.func @transform_0(%arg0: i32, %arg1: i32) -> (i32, i32, i32) {
    %c0_i32 = arith.constant 0 : i32
    %c0_i32_0 = arith.constant 0 : i32
    return %arg0, %arg1, %c0_i32 : i32, i32, i32
  }
  func.func @transform_1(%arg0: i32, %arg1: i32) -> (i32, i32, i32) {
    %c0_i32 = arith.constant 0 : i32
    %c0_i32_0 = arith.constant 0 : i32
    return %arg0, %arg1, %c0_i32 : i32, i32, i32
  }
  func.func @transform_2(%arg0: i32, %arg1: i32) -> (i32, i32) {
    %c0_i32 = arith.constant 0 : i32
    %c0_i32_0 = arith.constant 0 : i32
    return %arg0, %c0_i32 : i32, i32
  }
  func.func @transform_3(%arg0: i32, %arg1: i32) -> (i32, i32) {
    %c0_i32 = arith.constant 0 : i32
    %c0_i32_0 = arith.constant 0 : i32
    %c0_i32_1 = arith.constant 0 : i32
    return %c0_i32, %c0_i32_0 : i32, i32
  }
  func.func @transform_4(%arg0: i32, %arg1: i32) -> (i32, i32) {
    %c0_i32 = arith.constant 0 : i32
    %c0_i32_0 = arith.constant 0 : i32
    %c0_i32_1 = arith.constant 0 : i32
    return %c0_i32, %c0_i32_0 : i32, i32
  }
  func.func @transform_5(%arg0: i32, %arg1: i32) -> (i32, i32) {
    %c0_i32 = arith.constant 0 : i32
    %c0_i32_0 = arith.constant 0 : i32
    %c0_i32_1 = arith.constant 0 : i32
    return %c0_i32, %c0_i32_0 : i32, i32
  }
  func.func @transform_6(%arg0: i32, %arg1: i32) -> (i32, i32) {
    %c0_i32 = arith.constant 0 : i32
    %c0_i32_0 = arith.constant 0 : i32
    %c0_i32_1 = arith.constant 0 : i32
    return %c0_i32, %c0_i32_0 : i32, i32
  }
  func.func @transform_7(%arg0: i32, %arg1: i32) -> (i32, i32) {
    %c0_i32 = arith.constant 0 : i32
    %c0_i32_0 = arith.constant 0 : i32
    %c0_i32_1 = arith.constant 0 : i32
    return %c0_i32, %c0_i32_0 : i32, i32
  }
  func.func @transform_8(%arg0: i32, %arg1: i32) -> (i32, i32) {
    %c0_i32 = arith.constant 0 : i32
    %c0_i32_0 = arith.constant 0 : i32
    %c0_i32_1 = arith.constant 0 : i32
    return %c0_i32, %c0_i32_0 : i32, i32
  }
  func.func @transform_9(%arg0: i32, %arg1: i32) -> (i32, i32) {
    %c0_i32 = arith.constant 0 : i32
    %c0_i32_0 = arith.constant 0 : i32
    %c0_i32_1 = arith.constant 0 : i32
    return %c0_i32, %c0_i32_0 : i32, i32
  }
  func.func @transform_10(%arg0: i32, %arg1: i32) -> (i32, i32) {
    %c0_i32 = arith.constant 0 : i32
    %c0_i32_0 = arith.constant 0 : i32
    return %arg0, %c0_i32 : i32, i32
  }
  func.func @transform_11(%arg0: i32, %arg1: i32) -> (i32, i32) {
    %c0_i32 = arith.constant 0 : i32
    %c0_i32_0 = arith.constant 0 : i32
    %c0_i32_1 = arith.constant 0 : i32
    return %c0_i32, %c0_i32_0 : i32, i32
  }
  func.func @transform_12(%arg0: i32, %arg1: i32) -> (i32, i32) {
    %c0_i32 = arith.constant 0 : i32
    %c0_i32_0 = arith.constant 0 : i32
    %c0_i32_1 = arith.constant 0 : i32
    return %c0_i32, %c0_i32_0 : i32, i32
  }
  func.func @transform_13(%arg0: i32, %arg1: i32) -> (i32, i32) {
    %c0_i32 = arith.constant 0 : i32
    %c0_i32_0 = arith.constant 0 : i32
    %c0_i32_1 = arith.constant 0 : i32
    return %c0_i32, %c0_i32_0 : i32, i32
  }
  func.func @transform_14(%arg0: i32, %arg1: i32) -> (i32, i32) {
    %c0_i32 = arith.constant 0 : i32
    %c0_i32_0 = arith.constant 0 : i32
    return %arg0, %c0_i32 : i32, i32
  }
  func.func @transform_15(%arg0: i32, %arg1: i32) -> (i32, i32) {
    %c0_i32 = arith.constant 0 : i32
    %c0_i32_0 = arith.constant 0 : i32
    return %arg0, %c0_i32 : i32, i32
  }
}

</mosaic_0001>

<llo_original>
// kernel: tpu_custom_call.1
$region0: #{tpu_custom_call.1}
  #allocation0 [shape = 'u32[]', space=smem, size = 0x4, offset = 0x4, fixed_abs, tag = 'smem constant byte address 0x4 - core index']
  #allocation1 [shape = 'u32[144,128]{1,0:T(1,128)}', space=vmem, size = 0x12000, scoped, tag = 'internal scratch']
  #allocation2 [shape = 'f32[2,32]{1,0:T(2,128)}', space=vmem, size = 0x400, scoped, tag = 'scratch operand']
  %s0 = inlined_call_operand.vmem [shape: bf16[2,8,32], index: 0, kind: input, shape index: {}]
  %s1 = inlined_call_operand.vmem [shape: bf16[2,8,32], index: 1, kind: input, shape index: {}]
  %s2 = inlined_call_operand.vmem [shape: f32[2,4], index: 2, kind: input, shape index: {}]
  %s3 = inlined_call_operand.vmem [shape: f32[32,32], index: 3, kind: input, shape index: {}]
  %s4 = inlined_call_operand.vmem [shape: f32[4,32], index: 4, kind: input, shape index: {}]
  %s5 = inlined_call_operand.vmem [shape: f32[1,32], index: 5, kind: input, shape index: {}]
  %s6 = inlined_call_operand.vmem [shape: f32[32,16], index: 6, kind: input, shape index: {}]
  %s7 = inlined_call_operand.vmem [shape: f32[1,16], index: 7, kind: input, shape index: {}]
  %s8 = inlined_call_operand.vmem [shape: f32[32,16], index: 8, kind: input, shape index: {}]
  %s9 = inlined_call_operand.vmem [shape: f32[1,16], index: 9, kind: input, shape index: {}]
  %s10 = inlined_call_operand.vmem [shape: f32[2,16], index: 10, kind: input, shape index: {}]
  %s11 = inlined_call_operand.vmem [shape: f32[16,32], index: 11, kind: input, shape index: {}]
  %s12 = inlined_call_operand.vmem [shape: f32[4,32], index: 12, kind: input, shape index: {}]
  %s13 = inlined_call_operand.vmem [shape: f32[1,32], index: 13, kind: input, shape index: {}]
  %s14 = inlined_call_operand.hbm [shape: f32[2,32], index: 14, kind: output, shape index: {0}]
  %s15 = inlined_call_operand.vmem [shape: f32[2,1], index: 15, kind: output, shape index: {1}]
  %16 = xla_tuple %s14, %s15
  %s17 = sld [smem:[#allocation0]]
  $region82: #{tpu_custom_call.1} parent=0
    _
  %s19 = ssub.s32 1, %s17
  %s20 = scalar_select 0, %s19, %s17
  $region1: #{tpu_custom_call.1} parent=0
    #allocation3 [shape = 'u8[1024]{0}', space=vmem, size = 0x400, scoped, tag = 'output window, operand 0, single buffered']
    #allocation4 [shape = 's32[1]{0}', space=sflag, size = 0x4, scoped, tag = 'scoped memory for tpu_custom_call.1']
    %21 = vsyncpa [#allocation4], 0
    // Predicated region
    $region2: #{tpu_custom_call.1} parent=1 // pred_check
      _
    $region3: #{tpu_custom_call.1} parent=1 // pred_check_branch
      %23 = sbr.rel (0) target = $region5
    $region4: #{tpu_custom_call.1} parent=1 // pred_region
      _
    $region5: #{tpu_custom_call.1} parent=1 // pred_fallthru
      _
    // Predicated region
    $region6: #{tpu_custom_call.1} parent=1 // pred_check
      _
    $region7: #{tpu_custom_call.1} parent=1 // pred_check_branch
      %25 = sbr.rel (0) target = $region9
    $region8: #{tpu_custom_call.1} parent=1 // pred_region
      _
    $region9: #{tpu_custom_call.1} parent=1 // pred_fallthru
      _
    // Predicated region
    $region10: #{tpu_custom_call.1} parent=1 // pred_check
      _
    $region11: #{tpu_custom_call.1} parent=1 // pred_check_branch
      %27 = sbr.rel (0) target = $region13
    $region12: #{tpu_custom_call.1} parent=1 // pred_region
      _
    $region13: #{tpu_custom_call.1} parent=1 // pred_fallthru
      _
    // Predicated region
    $region14: #{tpu_custom_call.1} parent=1 // pred_check
      _
    $region15: #{tpu_custom_call.1} parent=1 // pred_check_branch
      %29 = sbr.rel (0) target = $region17
    $region16: #{tpu_custom_call.1} parent=1 // pred_region
      _
    $region17: #{tpu_custom_call.1} parent=1 // pred_fallthru
      _
    // Predicated region
    $region18: #{tpu_custom_call.1} parent=1 // pred_check
      _
    $region19: #{tpu_custom_call.1} parent=1 // pred_check_branch
      %31 = sbr.rel (0) target = $region21
    $region20: #{tpu_custom_call.1} parent=1 // pred_region
      _
    $region21: #{tpu_custom_call.1} parent=1 // pred_fallthru
      _
    // Predicated region
    $region22: #{tpu_custom_call.1} parent=1 // pred_check
      _
    $region23: #{tpu_custom_call.1} parent=1 // pred_check_branch
      %33 = sbr.rel (0) target = $region25
    $region24: #{tpu_custom_call.1} parent=1 // pred_region
      _
    $region25: #{tpu_custom_call.1} parent=1 // pred_fallthru
      _
    // Predicated region
    $region26: #{tpu_custom_call.1} parent=1 // pred_check
      _
    $region27: #{tpu_custom_call.1} parent=1 // pred_check_branch
      %35 = sbr.rel (0) target = $region29
    $region28: #{tpu_custom_call.1} parent=1 // pred_region
      _
    $region29: #{tpu_custom_call.1} parent=1 // pred_fallthru
      _
    // Predicated region
    $region30: #{tpu_custom_call.1} parent=1 // pred_check
      _
    $region31: #{tpu_custom_call.1} parent=1 // pred_check_branch
      %37 = sbr.rel (0) target = $region33
    $region32: #{tpu_custom_call.1} parent=1 // pred_region
      _
    $region33: #{tpu_custom_call.1} parent=1 // pred_fallthru
      _
    // Predicated region
    $region34: #{tpu_custom_call.1} parent=1 // pred_check
      _
    $region35: #{tpu_custom_call.1} parent=1 // pred_check_branch
      %39 = sbr.rel (0) target = $region37
    $region36: #{tpu_custom_call.1} parent=1 // pred_region
      _
    $region37: #{tpu_custom_call.1} parent=1 // pred_fallthru
      _
    // Predicated region
    $region38: #{tpu_custom_call.1} parent=1 // pred_check
      _
    $region39: #{tpu_custom_call.1} parent=1 // pred_check_branch
      %41 = sbr.rel (0) target = $region41
    $region40: #{tpu_custom_call.1} parent=1 // pred_region
      _
    $region41: #{tpu_custom_call.1} parent=1 // pred_fallthru
      _
    // Predicated region
    $region42: #{tpu_custom_call.1} parent=1 // pred_check
      _
    $region43: #{tpu_custom_call.1} parent=1 // pred_check_branch
      %43 = sbr.rel (0) target = $region45
    $region44: #{tpu_custom_call.1} parent=1 // pred_region
      _
    $region45: #{tpu_custom_call.1} parent=1 // pred_fallthru
      _
    // Predicated region
    $region46: #{tpu_custom_call.1} parent=1 // pred_check
      _
    $region47: #{tpu_custom_call.1} parent=1 // pred_check_branch
      %45 = sbr.rel (0) target = $region49
    $region48: #{tpu_custom_call.1} parent=1 // pred_region
      _
    $region49: #{tpu_custom_call.1} parent=1 // pred_fallthru
      _
    // Predicated region
    $region50: #{tpu_custom_call.1} parent=1 // pred_check
      _
    $region51: #{tpu_custom_call.1} parent=1 // pred_check_branch
      %47 = sbr.rel (0) target = $region53
    $region52: #{tpu_custom_call.1} parent=1 // pred_region
      _
    $region53: #{tpu_custom_call.1} parent=1 // pred_fallthru
      _
    // Predicated region
    $region54: #{tpu_custom_call.1} parent=1 // pred_check
      _
    $region55: #{tpu_custom_call.1} parent=1 // pred_check_branch
      %49 = sbr.rel (0) target = $region57
    $region56: #{tpu_custom_call.1} parent=1 // pred_region
      _
    $region57: #{tpu_custom_call.1} parent=1 // pred_fallthru
      _
    %p50 = scmp.eq.s32.totalorder 0, 0
    // Predicated region
    $region58: #{tpu_custom_call.1} parent=1 // pred_check
      %p51 = pneg %p50
    $region59: #{tpu_custom_call.1} parent=1 // pred_check_branch
      %53 = sbr.rel (%p51) target = $region61
    $region60: #{tpu_custom_call.1} parent=1 // pred_region
      %vm54 = vcmask 254976
      %55 = vst.msk [vmem:[#allocation2] sm:$0x3] %vm54, 0.0
    $region61: #{tpu_custom_call.1} parent=1 // pred_fallthru
      _
    %v56 = vld [vmem:[#allocation2] sm:$0x3]
    %v57 = vld [vmem:[%s1] sm:$0xf]
    %v58 = vld [vmem:[%s1 + $0x4] sm:$0xf]
    %v59 = vunpack.c.l.bf16 %v57
    %v60 = vunpack.c.l.bf16 %v58
    %vm61 = vcmask 261120
    %v62 = vsel %vm61, %v59, 0.0
    %v63 = vrot.slane %v62, 4
    %v64 = vadd.f32 %v62, %v63
    %v65 = vrot.slane %v64, 2
    %v66 = vadd.f32 %v64, %v65
    %v67 = vrot.slane %v66, 1
    %v68 = vadd.f32 %v66, %v67
    %v69 = vsel %vm61, %v60, 0.0
    %v70 = vrot.slane %v69, 4
    %v71 = vadd.f32 %v69, %v70
    %v72 = vrot.slane %v71, 2
    %v73 = vadd.f32 %v71, %v72
    %v74 = vrot.slane %v73, 1
    %v75 = vadd.f32 %v73, %v74
    %v76 = vld [vmem:[%s0] sm:$0xf]
    %v77 = vld [vmem:[%s0 + $0x4] sm:$0xf]
    %v78 = vunpack.c.l.bf16 %v76
    %v79 = vunpack.c.l.bf16 %v77
    %v80 = vsel %vm61, %v78, 0.0
    %v81 = vrot.slane %v80, 4
    %v82 = vadd.f32 %v80, %v81
    %v83 = vrot.slane %v82, 2
    %v84 = vadd.f32 %v82, %v83
    %v85 = vrot.slane %v84, 1
    %v86 = vadd.f32 %v84, %v85
    %v87 = vsel %vm61, %v79, 0.0
    %v88 = vrot.slane %v87, 4
    %v89 = vadd.f32 %v87, %v88
    %v90 = vrot.slane %v89, 2
    %v91 = vadd.f32 %v89, %v90
    %v92 = vrot.slane %v91, 1
    %v93 = vadd.f32 %v91, %v92
    %v94 = vsub.f32 %v68, %v86
    %v95 = vsub.f32 %v75, %v93
    %vm98 = vcmask 1041409
    %v99 = vsel %vm98, %v95, %v94
    %v101 = vadd.f32 %v56, %v99
    %vm102 = vcmask 254976
    %103 = vst.msk [vmem:[#allocation2] sm:$0x3] %vm102, %v101
    // Predicated region
    $region62: #{tpu_custom_call.1} parent=1 // pred_check
      %p104 = pneg %p50
    $region63: #{tpu_custom_call.1} parent=1 // pred_check_branch
      %106 = sbr.rel (%p104) target = $region65
    $region64: #{tpu_custom_call.1} parent=1 // pred_region
      %v107 = vld [vmem:[#allocation2] sm:$0x3]
      %v108 = vld [vmem:[%s2] sm:$0x3]
      %v109 = vld [vmem:[%s3] sm:$0xff]
      %v110 = vld [vmem:[%s3 + $0x8] sm:$0xff]
      %v111 = vld [vmem:[%s3 + $0x10] sm:$0xff]
      %v112 = vld [vmem:[%s3 + $0x18] sm:$0xff]
      %v113 = vld [vmem:[%s4] sm:$0xf]
      %vm114 = vcmask 31744
      %v116 = vsel %vm114, %v108, 0
      %vm118 = vcmask 1043456
      %v120 = vsel %vm118, %v113, 0
      %122 = vmatprep.subr.mxu0 0.0
      %123 = vmatpush1.msra.mxu0 0.0
      %124 = vmatprep.subr.mxu0 0.0
      %125 = vmatpush1.msra.mxu0 0.0
      %126 = vmatprep.subr.mxu0 0.0
      %127 = vmatpush1.msra.mxu0 0.0
      %128 = vmatprep.subr.mxu0 0.0
      %129 = vmatpush1.msra.mxu0 0.0
      %130 = vmatprep.subr.mxu0 0.0
      %131 = vmatpush1.msra.mxu0 0.0
      %132 = vmatprep.subr.mxu0 0.0
      %133 = vmatpush1.msra.mxu0 0.0
      %134 = vmatprep.subr.mxu0 0.0
      %135 = vmatpush1.msra.mxu0 0.0
      %136 = vmatprep.subr.mxu0 0.0
      %137 = vmatpush1.msra.mxu0 0.0
      %138 = vmatprep.subr.mxu0 0.0
      %139 = vmatpush1.msra.mxu0 0.0
      %140 = vmatprep.subr.mxu0 0.0
      %141 = vmatpush1.msra.mxu0 0.0
      %142 = vmatprep.subr.mxu0 0.0
      %143 = vmatpush1.msra.mxu0 0.0
      %144 = vmatprep.subr.mxu0 0.0
      %145 = vmatpush1.msra.mxu0 0.0
      %146 = vmatprep.subr.mxu0 0.0
      %147 = vmatpush1.msra.mxu0 0.0
      %148 = vmatprep.subr.mxu0 0.0
      %149 = vmatpush1.msra.mxu0 0.0
      %150 = vmatprep.subr.mxu0 0.0
      %151 = vmatpush1.msra.mxu0 0.0
      %152 = vmatprep.subr.mxu0 0.0
      %153 = vmatpush1.msra.mxu0 %v120
      %154 = vmatprep.subr.mxu0 0.0
      %155 = vmatpush2.msra.mxu0 0.0
      %156 = vmatprep.subr.mxu0 0.0
      %157 = vmatpush2.msra.mxu0 0.0
      %158 = vmatprep.subr.mxu0 0.0
      %159 = vmatpush2.msra.mxu0 0.0
      %160 = vmatprep.subr.mxu0 0.0
      %161 = vmatpush2.msra.mxu0 0.0
      %162 = vmatprep.subr.mxu0 0.0
      %163 = vmatpush2.msra.mxu0 0.0
      %164 = vmatprep.subr.mxu0 0.0
      %165 = vmatpush2.msra.mxu0 0.0
      %166 = vmatprep.subr.mxu0 0.0
      %167 = vmatpush2.msra.mxu0 0.0
      %168 = vmatprep.subr.mxu0 0.0
      %169 = vmatpush2.msra.mxu0 0.0
      %170 = vmatprep.subr.mxu0 0.0
      %171 = vmatpush2.msra.mxu0 0.0
      %172 = vmatprep.subr.mxu0 0.0
      %173 = vmatpush2.msra.mxu0 0.0
      %174 = vmatprep.subr.mxu0 0.0
      %175 = vmatpush2.msra.mxu0 0.0
      %176 = vmatprep.subr.mxu0 0.0
      %177 = vmatpush2.msra.mxu0 0.0
      %178 = vmatprep.subr.mxu0 0.0
      %179 = vmatpush2.msra.mxu0 0.0
      %180 = vmatprep.subr.mxu0 0.0
      %181 = vmatpush2.msra.mxu0 0.0
      %182 = vmatprep.subr.mxu0 0.0
      %183 = vmatpush2.msra.mxu0 0.0
      %184 = vmatprep.subr.mxu0 0.0
      %185 = vmatpush2.msra.mxu0 0.0
      %186 = vmatprep.mubr.f32.mxu0 0.0
      %187 = vmatmul.mubr.f32.gmra.mxu0 %v116
      %v188 = vpop.f32.mrf.mxu0
      %v189 = vadd.f32 0.0, %v188
      %v190 = vpop.f32.mrf.mxu0
      %191 = vdwg.mxu0
      %v193 = vsel %vm61, %v107, 0
      %195 = vmatprep.subr.mxu0 0.0
      %196 = vmatpush1.msra.mxu0 0.0
      %197 = vmatprep.subr.mxu0 0.0
      %198 = vmatpush1.msra.mxu0 0.0
      %199 = vmatprep.subr.mxu0 0.0
      %200 = vmatpush1.msra.mxu0 0.0
      %201 = vmatprep.subr.mxu0 0.0
      %202 = vmatpush1.msra.mxu0 0.0
      %203 = vmatprep.subr.mxu0 0.0
      %204 = vmatpush1.msra.mxu0 0.0
      %205 = vmatprep.subr.mxu0 0.0
      %206 = vmatpush1.msra.mxu0 0.0
      %207 = vmatprep.subr.mxu0 0.0
      %208 = vmatpush1.msra.mxu0 0.0
      %209 = vmatprep.subr.mxu0 0.0
      %210 = vmatpush1.msra.mxu0 0.0
      %211 = vmatprep.subr.mxu0 0.0
      %212 = vmatpush1.msra.mxu0 0.0
      %213 = vmatprep.subr.mxu0 0.0
      %214 = vmatpush1.msra.mxu0 0.0
      %215 = vmatprep.subr.mxu0 0.0
      %216 = vmatpush1.msra.mxu0 0.0
      %217 = vmatprep.subr.mxu0 0.0
      %218 = vmatpush1.msra.mxu0 0.0
      %219 = vmatprep.subr.mxu0 0.0
      %220 = vmatpush1.msra.mxu0 %v112
      %221 = vmatprep.subr.mxu0 0.0
      %222 = vmatpush1.msra.mxu0 %v111
      %223 = vmatprep.subr.mxu0 0.0
      %224 = vmatpush1.msra.mxu0 %v110
      %225 = vmatprep.subr.mxu0 0.0
      %226 = vmatpush1.msra.mxu0 %v109
      %227 = vmatprep.subr.mxu0 0.0
      %228 = vmatpush2.msra.mxu0 0.0
      %229 = vmatprep.subr.mxu0 0.0
      %230 = vmatpush2.msra.mxu0 0.0
      %231 = vmatprep.subr.mxu0 0.0
      %232 = vmatpush2.msra.mxu0 0.0
      %233 = vmatprep.subr.mxu0 0.0
      %234 = vmatpush2.msra.mxu0 0.0
      %235 = vmatprep.subr.mxu0 0.0
      %236 = vmatpush2.msra.mxu0 0.0
      %237 = vmatprep.subr.mxu0 0.0
      %238 = vmatpush2.msra.mxu0 0.0
      %239 = vmatprep.subr.mxu0 0.0
      %240 = vmatpush2.msra.mxu0 0.0
      %241 = vmatprep.subr.mxu0 0.0
      %242 = vmatpush2.msra.mxu0 0.0
      %243 = vmatprep.subr.mxu0 0.0
      %244 = vmatpush2.msra.mxu0 0.0
      %245 = vmatprep.subr.mxu0 0.0
      %246 = vmatpush2.msra.mxu0 0.0
      %247 = vmatprep.subr.mxu0 0.0
      %248 = vmatpush2.msra.mxu0 0.0
      %249 = vmatprep.subr.mxu0 0.0
      %250 = vmatpush2.msra.mxu0 0.0
      %251 = vmatprep.subr.mxu0 0.0
      %252 = vmatpush2.msra.mxu0 0.0
      %253 = vmatprep.subr.mxu0 0.0
      %254 = vmatpush2.msra.mxu0 0.0
      %255 = vmatprep.subr.mxu0 0.0
      %256 = vmatpush2.msra.mxu0 0.0
      %257 = vmatprep.subr.mxu0 0.0
      %258 = vmatpush2.msra.mxu0 0.0
      %259 = vmatprep.mubr.f32.mxu0 0.0
      %260 = vmatmul.mubr.f32.gmra.mxu0 %v193
      %v261 = vpop.f32.mrf.mxu0
      %v262 = vadd.f32 %v189, %v261
      %v263 = vpop.f32.mrf.mxu0
      %264 = vdwg.mxu0
      %v265 = vld [vmem:[%s5] sm:$0x1]
      %v267 = vlaneseq
      %v268 = vshrl.u32 %v267, 7
      %v269 = vsub.s32 0, %v268
      %v270 = vrot.slane %v265, %v269
      %v272 = vadd.f32 %v262, %v270
      %v273 = vmax.f32 %v272, 0.0
      %v274 = vld [vmem:[%s6] sm:$0xff]
      %v275 = vld [vmem:[%s6 + $0x8] sm:$0xff]
      %v276 = vld [vmem:[%s6 + $0x10] sm:$0xff]
      %v277 = vld [vmem:[%s6 + $0x18] sm:$0xff]
      %v278 = vld [vmem:[%s7] sm:$0x1]
      %v280 = vlaneseq
      %v281 = vshrl.u32 %v280, 7
      %v282 = vsub.s32 0, %v281
      %v283 = vrot.slane %v278, %v282
      %v286 = vsel %vm61, %v273, 0
      %288 = vmatprep.subr.mxu0 0.0
      %289 = vmatpush1.msra.mxu0 0.0
      %290 = vmatprep.subr.mxu0 0.0
      %291 = vmatpush1.msra.mxu0 0.0
      %292 = vmatprep.subr.mxu0 0.0
      %293 = vmatpush1.msra.mxu0 0.0
      %294 = vmatprep.subr.mxu0 0.0
      %295 = vmatpush1.msra.mxu0 0.0
      %296 = vmatprep.subr.mxu0 0.0
      %297 = vmatpush1.msra.mxu0 0.0
      %298 = vmatprep.subr.mxu0 0.0
      %299 = vmatpush1.msra.mxu0 0.0
      %300 = vmatprep.subr.mxu0 0.0
      %301 = vmatpush1.msra.mxu0 0.0
      %302 = vmatprep.subr.mxu0 0.0
      %303 = vmatpush1.msra.mxu0 0.0
      %304 = vmatprep.subr.mxu0 0.0
      %305 = vmatpush1.msra.mxu0 0.0
      %306 = vmatprep.subr.mxu0 0.0
      %307 = vmatpush1.msra.mxu0 0.0
      %308 = vmatprep.subr.mxu0 0.0
      %309 = vmatpush1.msra.mxu0 0.0
      %310 = vmatprep.subr.mxu0 0.0
      %311 = vmatpush1.msra.mxu0 0.0
      %312 = vmatprep.subr.mxu0 0.0
      %313 = vmatpush1.msra.mxu0 %v277
      %314 = vmatprep.subr.mxu0 0.0
      %315 = vmatpush1.msra.mxu0 %v276
      %316 = vmatprep.subr.mxu0 0.0
      %317 = vmatpush1.msra.mxu0 %v275
      %318 = vmatprep.subr.mxu0 0.0
      %319 = vmatpush1.msra.mxu0 %v274
      %320 = vmatprep.subr.mxu0 0.0
      %321 = vmatpush2.msra.mxu0 0.0
      %322 = vmatprep.subr.mxu0 0.0
      %323 = vmatpush2.msra.mxu0 0.0
      %324 = vmatprep.subr.mxu0 0.0
      %325 = vmatpush2.msra.mxu0 0.0
      %326 = vmatprep.subr.mxu0 0.0
      %327 = vmatpush2.msra.mxu0 0.0
      %328 = vmatprep.subr.mxu0 0.0
      %329 = vmatpush2.msra.mxu0 0.0
      %330 = vmatprep.subr.mxu0 0.0
      %331 = vmatpush2.msra.mxu0 0.0
      %332 = vmatprep.subr.mxu0 0.0
      %333 = vmatpush2.msra.mxu0 0.0
      %334 = vmatprep.subr.mxu0 0.0
      %335 = vmatpush2.msra.mxu0 0.0
      %336 = vmatprep.subr.mxu0 0.0
      %337 = vmatpush2.msra.mxu0 0.0
      %338 = vmatprep.subr.mxu0 0.0
      %339 = vmatpush2.msra.mxu0 0.0
      %340 = vmatprep.subr.mxu0 0.0
      %341 = vmatpush2.msra.mxu0 0.0
      %342 = vmatprep.subr.mxu0 0.0
      %343 = vmatpush2.msra.mxu0 0.0
      %344 = vmatprep.subr.mxu0 0.0
      %345 = vmatpush2.msra.mxu0 0.0
      %346 = vmatprep.subr.mxu0 0.0
      %347 = vmatpush2.msra.mxu0 0.0
      %348 = vmatprep.subr.mxu0 0.0
      %349 = vmatpush2.msra.mxu0 0.0
      %350 = vmatprep.subr.mxu0 0.0
      %351 = vmatpush2.msra.mxu0 0.0
      %352 = vmatprep.mubr.f32.mxu0 0.0
      %353 = vmatmul.mubr.f32.gmra.mxu0 %v286
      %v354 = vpop.f32.mrf.mxu0
      %v355 = vadd.f32 %v283, %v354
      %v356 = vpop.f32.mrf.mxu0
      %357 = vdwg.mxu0
      %v358 = vld [vmem:[%s8] sm:$0xff]
      %v359 = vld [vmem:[%s8 + $0x8] sm:$0xff]
      %v360 = vld [vmem:[%s8 + $0x10] sm:$0xff]
      %v361 = vld [vmem:[%s8 + $0x18] sm:$0xff]
      %v362 = vld [vmem:[%s9] sm:$0x1]
      %v364 = vlaneseq
      %v365 = vshrl.u32 %v364, 7
      %v366 = vsub.s32 0, %v365
      %v367 = vrot.slane %v362, %v366
      %369 = vmatprep.subr.mxu0 0.0
      %370 = vmatpush1.msra.mxu0 0.0
      %371 = vmatprep.subr.mxu0 0.0
      %372 = vmatpush1.msra.mxu0 0.0
      %373 = vmatprep.subr.mxu0 0.0
      %374 = vmatpush1.msra.mxu0 0.0
      %375 = vmatprep.subr.mxu0 0.0
      %376 = vmatpush1.msra.mxu0 0.0
      %377 = vmatprep.subr.mxu0 0.0
      %378 = vmatpush1.msra.mxu0 0.0
      %379 = vmatprep.subr.mxu0 0.0
      %380 = vmatpush1.msra.mxu0 0.0
      %381 = vmatprep.subr.mxu0 0.0
      %382 = vmatpush1.msra.mxu0 0.0
      %383 = vmatprep.subr.mxu0 0.0
      %384 = vmatpush1.msra.mxu0 0.0
      %385 = vmatprep.subr.mxu0 0.0
      %386 = vmatpush1.msra.mxu0 0.0
      %387 = vmatprep.subr.mxu0 0.0
      %388 = vmatpush1.msra.mxu0 0.0
      %389 = vmatprep.subr.mxu0 0.0
      %390 = vmatpush1.msra.mxu0 0.0
      %391 = vmatprep.subr.mxu0 0.0
      %392 = vmatpush1.msra.mxu0 0.0
      %393 = vmatprep.subr.mxu0 0.0
      %394 = vmatpush1.msra.mxu0 %v361
      %395 = vmatprep.subr.mxu0 0.0
      %396 = vmatpush1.msra.mxu0 %v360
      %397 = vmatprep.subr.mxu0 0.0
      %398 = vmatpush1.msra.mxu0 %v359
      %399 = vmatprep.subr.mxu0 0.0
      %400 = vmatpush1.msra.mxu0 %v358
      %401 = vmatprep.subr.mxu0 0.0
      %402 = vmatpush2.msra.mxu0 0.0
      %403 = vmatprep.subr.mxu0 0.0
      %404 = vmatpush2.msra.mxu0 0.0
      %405 = vmatprep.subr.mxu0 0.0
      %406 = vmatpush2.msra.mxu0 0.0
      %407 = vmatprep.subr.mxu0 0.0
      %408 = vmatpush2.msra.mxu0 0.0
      %409 = vmatprep.subr.mxu0 0.0
      %410 = vmatpush2.msra.mxu0 0.0
      %411 = vmatprep.subr.mxu0 0.0
      %412 = vmatpush2.msra.mxu0 0.0
      %413 = vmatprep.subr.mxu0 0.0
      %414 = vmatpush2.msra.mxu0 0.0
      %415 = vmatprep.subr.mxu0 0.0
      %416 = vmatpush2.msra.mxu0 0.0
      %417 = vmatprep.subr.mxu0 0.0
      %418 = vmatpush2.msra.mxu0 0.0
      %419 = vmatprep.subr.mxu0 0.0
      %420 = vmatpush2.msra.mxu0 0.0
      %421 = vmatprep.subr.mxu0 0.0
      %422 = vmatpush2.msra.mxu0 0.0
      %423 = vmatprep.subr.mxu0 0.0
      %424 = vmatpush2.msra.mxu0 0.0
      %425 = vmatprep.subr.mxu0 0.0
      %426 = vmatpush2.msra.mxu0 0.0
      %427 = vmatprep.subr.mxu0 0.0
      %428 = vmatpush2.msra.mxu0 0.0
      %429 = vmatprep.subr.mxu0 0.0
      %430 = vmatpush2.msra.mxu0 0.0
      %431 = vmatprep.subr.mxu0 0.0
      %432 = vmatpush2.msra.mxu0 0.0
      %433 = vmatprep.mubr.f32.mxu0 0.0
      %434 = vmatmul.mubr.f32.gmra.mxu0 %v286
      %v435 = vpop.f32.mrf.mxu0
      %v436 = vadd.f32 %v367, %v435
      %v437 = vpop.f32.mrf.mxu0
      %438 = vdwg.mxu0
      %v439 = vand.u32 2147483647, %v436
      %v440 = vsub.f32 0.0, %v439
      %v441 = vmul.f32 %v440, 0.5
      %v442 = vmul.f32 %v441, 1.442695
      %v443 = vpow.pop %v442
      %v444 = vmul.f32 %v443, %v443
      %v445 = vadd.f32 %v440, 1.0
      %v446 = vmul.f32 %v355, %v355
      %v447 = vsub.f32 %v445, %v446
      %v448 = vsub.f32 %v447, %v444
      %vm449 = vcmask 123904
      %v450 = vsel %vm449, %v448, 0.0
      %451 = vadd.xlane.f32.xlu0 %v450
      %v452 = vpop.xlane.xlu0 %451
      %v453 = vmul.f32 %v452, -0.5
      %vm454 = vcmask 1024
      %455 = vst.msk [vmem:[%s15] sm:$0x3] %vm454, %v453
      %v456 = vld [vmem:[%s10] sm:$0x3]
      %v457 = vmul.f32 %v443, %v456
      %v458 = vadd.f32 %v355, %v457
      %v459 = vld [vmem:[%s11] sm:$0xff]
      %v460 = vld [vmem:[%s11 + $0x8] sm:$0xff]
      %v461 = vld [vmem:[%s12] sm:$0xf]
      %v463 = vsel %vm118, %v461, 0
      %465 = vmatprep.subr.mxu0 0.0
      %466 = vmatpush1.msra.mxu0 0.0
      %467 = vmatprep.subr.mxu0 0.0
      %468 = vmatpush1.msra.mxu0 0.0
      %469 = vmatprep.subr.mxu0 0.0
      %470 = vmatpush1.msra.mxu0 0.0
      %471 = vmatprep.subr.mxu0 0.0
      %472 = vmatpush1.msra.mxu0 0.0
      %473 = vmatprep.subr.mxu0 0.0
      %474 = vmatpush1.msra.mxu0 0.0
      %475 = vmatprep.subr.mxu0 0.0
      %476 = vmatpush1.msra.mxu0 0.0
      %477 = vmatprep.subr.mxu0 0.0
      %478 = vmatpush1.msra.mxu0 0.0
      %479 = vmatprep.subr.mxu0 0.0
      %480 = vmatpush1.msra.mxu0 0.0
      %481 = vmatprep.subr.mxu0 0.0
      %482 = vmatpush1.msra.mxu0 0.0
      %483 = vmatprep.subr.mxu0 0.0
      %484 = vmatpush1.msra.mxu0 0.0
      %485 = vmatprep.subr.mxu0 0.0
      %486 = vmatpush1.msra.mxu0 0.0
      %487 = vmatprep.subr.mxu0 0.0
      %488 = vmatpush1.msra.mxu0 0.0
      %489 = vmatprep.subr.mxu0 0.0
      %490 = vmatpush1.msra.mxu0 0.0
      %491 = vmatprep.subr.mxu0 0.0
      %492 = vmatpush1.msra.mxu0 0.0
      %493 = vmatprep.subr.mxu0 0.0
      %494 = vmatpush1.msra.mxu0 0.0
      %495 = vmatprep.subr.mxu0 0.0
      %496 = vmatpush1.msra.mxu0 %v463
      %497 = vmatprep.subr.mxu0 0.0
      %498 = vmatpush2.msra.mxu0 0.0
      %499 = vmatprep.subr.mxu0 0.0
      %500 = vmatpush2.msra.mxu0 0.0
      %501 = vmatprep.subr.mxu0 0.0
      %502 = vmatpush2.msra.mxu0 0.0
      %503 = vmatprep.subr.mxu0 0.0
      %504 = vmatpush2.msra.mxu0 0.0
      %505 = vmatprep.subr.mxu0 0.0
      %506 = vmatpush2.msra.mxu0 0.0
      %507 = vmatprep.subr.mxu0 0.0
      %508 = vmatpush2.msra.mxu0 0.0
      %509 = vmatprep.subr.mxu0 0.0
      %510 = vmatpush2.msra.mxu0 0.0
      %511 = vmatprep.subr.mxu0 0.0
      %512 = vmatpush2.msra.mxu0 0.0
      %513 = vmatprep.subr.mxu0 0.0
      %514 = vmatpush2.msra.mxu0 0.0
      %515 = vmatprep.subr.mxu0 0.0
      %516 = vmatpush2.msra.mxu0 0.0
      %517 = vmatprep.subr.mxu0 0.0
      %518 = vmatpush2.msra.mxu0 0.0
      %519 = vmatprep.subr.mxu0 0.0
      %520 = vmatpush2.msra.mxu0 0.0
      %521 = vmatprep.subr.mxu0 0.0
      %522 = vmatpush2.msra.mxu0 0.0
      %523 = vmatprep.subr.mxu0 0.0
      %524 = vmatpush2.msra.mxu0 0.0
      %525 = vmatprep.subr.mxu0 0.0
      %526 = vmatpush2.msra.mxu0 0.0
      %527 = vmatprep.subr.mxu0 0.0
      %528 = vmatpush2.msra.mxu0 0.0
      %529 = vmatprep.mubr.f32.mxu0 0.0
      %530 = vmatmul.mubr.f32.gmra.mxu0 %v116
      %v531 = vpop.f32.mrf.mxu0
      %v532 = vadd.f32 0.0, %v531
      %v533 = vpop.f32.mrf.mxu0
      %534 = vdwg.mxu0
      %vm535 = vcmask 130048
      %v537 = vsel %vm535, %v458, 0
      %539 = vmatprep.subr.mxu0 0.0
      %540 = vmatpush1.msra.mxu0 0.0
      %541 = vmatprep.subr.mxu0 0.0
      %542 = vmatpush1.msra.mxu0 0.0
      %543 = vmatprep.subr.mxu0 0.0
      %544 = vmatpush1.msra.mxu0 0.0
      %545 = vmatprep.subr.mxu0 0.0
      %546 = vmatpush1.msra.mxu0 0.0
      %547 = vmatprep.subr.mxu0 0.0
      %548 = vmatpush1.msra.mxu0 0.0
      %549 = vmatprep.subr.mxu0 0.0
      %550 = vmatpush1.msra.mxu0 0.0
      %551 = vmatprep.subr.mxu0 0.0
      %552 = vmatpush1.msra.mxu0 0.0
      %553 = vmatprep.subr.mxu0 0.0
      %554 = vmatpush1.msra.mxu0 0.0
      %555 = vmatprep.subr.mxu0 0.0
      %556 = vmatpush1.msra.mxu0 0.0
      %557 = vmatprep.subr.mxu0 0.0
      %558 = vmatpush1.msra.mxu0 0.0
      %559 = vmatprep.subr.mxu0 0.0
      %560 = vmatpush1.msra.mxu0 0.0
      %561 = vmatprep.subr.mxu0 0.0
      %562 = vmatpush1.msra.mxu0 0.0
      %563 = vmatprep.subr.mxu0 0.0
      %564 = vmatpush1.msra.mxu0 0.0
      %565 = vmatprep.subr.mxu0 0.0
      %566 = vmatpush1.msra.mxu0 0.0
      %567 = vmatprep.subr.mxu0 0.0
      %568 = vmatpush1.msra.mxu0 %v460
      %569 = vmatprep.subr.mxu0 0.0
      %570 = vmatpush1.msra.mxu0 %v459
      %571 = vmatprep.subr.mxu0 0.0
      %572 = vmatpush2.msra.mxu0 0.0
      %573 = vmatprep.subr.mxu0 0.0
      %574 = vmatpush2.msra.mxu0 0.0
      %575 = vmatprep.subr.mxu0 0.0
      %576 = vmatpush2.msra.mxu0 0.0
      %577 = vmatprep.subr.mxu0 0.0
      %578 = vmatpush2.msra.mxu0 0.0
      %579 = vmatprep.subr.mxu0 0.0
      %580 = vmatpush2.msra.mxu0 0.0
      %581 = vmatprep.subr.mxu0 0.0
      %582 = vmatpush2.msra.mxu0 0.0
      %583 = vmatprep.subr.mxu0 0.0
      %584 = vmatpush2.msra.mxu0 0.0
      %585 = vmatprep.subr.mxu0 0.0
      %586 = vmatpush2.msra.mxu0 0.0
      %587 = vmatprep.subr.mxu0 0.0
      %588 = vmatpush2.msra.mxu0 0.0
      %589 = vmatprep.subr.mxu0 0.0
      %590 = vmatpush2.msra.mxu0 0.0
      %591 = vmatprep.subr.mxu0 0.0
      %592 = vmatpush2.msra.mxu0 0.0
      %593 = vmatprep.subr.mxu0 0.0
      %594 = vmatpush2.msra.mxu0 0.0
      %595 = vmatprep.subr.mxu0 0.0
      %596 = vmatpush2.msra.mxu0 0.0
      %597 = vmatprep.subr.mxu0 0.0
      %598 = vmatpush2.msra.mxu0 0.0
      %599 = vmatprep.subr.mxu0 0.0
      %600 = vmatpush2.msra.mxu0 0.0
      %601 = vmatprep.subr.mxu0 0.0
      %602 = vmatpush2.msra.mxu0 0.0
      %603 = vmatprep.mubr.f32.mxu0 0.0
      %604 = vmatmul.mubr.f32.gmra.mxu0 %v537
      %v605 = vpop.f32.mrf.mxu0
      %v606 = vadd.f32 %v532, %v605
      %v607 = vpop.f32.mrf.mxu0
      %608 = vdwg.mxu0
      %v609 = vld [vmem:[%s13] sm:$0x1]
      %v611 = vlaneseq
      %v612 = vshrl.u32 %v611, 7
      %v613 = vsub.s32 0, %v612
      %v614 = vrot.slane %v609, %v613
      %v616 = vadd.f32 %v606, %v614
      %617 = vst.msk [vmem:[#allocation3] sm:$0x3] %vm102, %v616
    $region65: #{tpu_custom_call.1} parent=1 // pred_fallthru
      _
    // Predicated region
    $region66: #{tpu_custom_call.1} parent=1 // pred_check
      _
    $region67: #{tpu_custom_call.1} parent=1 // pred_check_branch
      %619 = sbr.rel (0) target = $region69
    $region68: #{tpu_custom_call.1} parent=1 // pred_region
      %s621 = ssub.s32 32, 32
      %622 = vsyncadd [#allocation4], %s621
      %s624 = sshll.u32 [#allocation3], 4
      %s625 = int_to_ptr.vmem [resolvable:$true] %s624
      %627 = dma.vmem_to_hbm [thread:$0]  %s625, 32, %s14, [#allocation4]
    $region69: #{tpu_custom_call.1} parent=1 // pred_fallthru
      _
    // Predicated region
    $region70: #{tpu_custom_call.1} parent=1 // pred_check
      _
    $region71: #{tpu_custom_call.1} parent=1 // pred_check_branch
      %629 = sbr.rel (0) target = $region73
    $region72: #{tpu_custom_call.1} parent=1 // pred_region
      _
    $region73: #{tpu_custom_call.1} parent=1 // pred_fallthru
      _
    // Predicated region
    $region74: #{tpu_custom_call.1} parent=1 // pred_check
      _
    $region75: #{tpu_custom_call.1} parent=1 // pred_check_branch
      %631 = sbr.rel (0) target = $region77
    $region76: #{tpu_custom_call.1} parent=1 // pred_region
      %632 = dma.done [#allocation4], 32
    $region77: #{tpu_custom_call.1} parent=1 // pred_fallthru
      _
    // Predicated region
    $region78: #{tpu_custom_call.1} parent=1 // pred_check
      _
    $region79: #{tpu_custom_call.1} parent=1 // pred_check_branch
      %634 = sbr.rel (0) target = $region81
    $region80: #{tpu_custom_call.1} parent=1 // pred_region
      _
    $region81: #{tpu_custom_call.1} parent=1 // pred_fallthru
      _
    %635 = vsyncpa [#allocation4], 1

</llo_original>
